<compile_context>
chip_gen: v7x
topology: tpu7x:2x2x1
jax: 0.10.0
libtpu: 0.0.40
codegen_flags: <defaults>
</compile_context>

<pallas_src>
import jax
import jax.numpy as jnp
from jax.experimental import pallas as pl
from jax.experimental.pallas import tpu as pltpu


def _copy_prefix_kernel(x_ref, o_ref):
    # Blocks: x_ref (1, tile_c, t_in), o_ref (1, tile_c, t_out), t_out <= t_in.
    # In the T-tiled path t_in == t_out and this lowers to a plain block copy.
    o_ref[...] = x_ref[:, :, : o_ref.shape[-1]]


def _round_up(x, m):
    return ((x + m - 1) // m) * m


def _sublane_step(itemsize):
    # Sublane packing factor: 8 rows/vreg at 32-bit, 16 at 16-bit, 32 at 8-bit.
    return max(8, 32 // int(itemsize))


def same_pad_layer(x, num_conv_pos_embeddings):
    """Pallas implementation of SamePadLayer.forward.

    x: jnp.ndarray of shape (B, C, T)
    num_conv_pos_embeddings: python int (static)
    """
    num_pad_remove = 1 if num_conv_pos_embeddings % 2 == 0 else 0
    if num_pad_remove == 0:
        # Identity path: never pay an HBM copy just to reproduce the input.
        return x

    B, C, T = x.shape
    T_out = T - num_pad_remove
    if T_out <= 0:
        return x[:, :, :T_out]

    itemsize = jnp.dtype(x.dtype).itemsize
    sub = _sublane_step(itemsize)

    # Target live (double-buffered in+out) bytes. A pure HBM copy is already at
    # roofline with ~0.5-2 MiB tiles; keeps far under v7x's 64 MiB VMEM.
    budget = 6 * 1024 * 1024

    if T_out >= 128:
        # Lane-dense T tiling: identical in/out block shapes, unmasked stores.
        tile_t = 512 if T_out >= 512 else _round_up(T_out, 128)
        max_tc = budget // (4 * tile_t * itemsize)  # 2 bufs each for in + out
        max_tc = max(sub, (max_tc // sub) * sub)
        tile_c = C if C <= max_tc else max_tc
    else:
        # Short sequences: full-extent T blocks (layout-legal for any odd T),
        # drop the last element via an in-kernel static slice.
        tile_t = None
        max_tc = budget // (2 * (T + T_out) * itemsize)
        max_tc = max(sub, (max_tc // sub) * sub)
        tile_c = C if C <= max_tc else max_tc

    c_steps = pl.cdiv(C, tile_c)
    t_steps = 1 if tile_t is None else pl.cdiv(T_out, tile_t)

    # Guarantee >= 2 steps on a "parallel" axis so v7x can use both TensorCores
    # even when B == 1.
    if B * c_steps * t_steps < 2:
        if tile_t is not None and tile_t >= 256:
            tile_t = max(128, ((tile_t // 2) // 128) * 128)
            t_steps = pl.cdiv(T_out, tile_t)
        elif C > sub:
            tile_c = max(sub, ((C // 2) // sub) * sub)
            c_steps = pl.cdiv(C, tile_c)

    if tile_t is None:
        grid = (B, c_steps)
        in_spec = pl.BlockSpec((1, tile_c, T), lambda b, c: (b, c, 0))
        out_spec = pl.BlockSpec((1, tile_c, T_out), lambda b, c: (b, c, 0))
        live = 2 * tile_c * (T + T_out) * itemsize
        semantics = ("parallel", "parallel")
    else:
        grid = (B, c_steps, t_steps)
        in_spec = pl.BlockSpec((1, tile_c, tile_t), lambda b, c, t: (b, c, t))
        out_spec = pl.BlockSpec((1, tile_c, tile_t), lambda b, c, t: (b, c, t))
        live = 4 * tile_c * tile_t * itemsize
        semantics = ("parallel", "parallel", "parallel")

    # Enough for the live tiles + headroom; never claim all of v7x's 64 MiB.
    vmem_limit = int(min(max(live + (4 << 20), 16 << 20), 48 << 20))
    bytes_accessed = B * C * (T + T_out) * itemsize

    return pl.pallas_call(
        _copy_prefix_kernel,
        out_shape=jax.ShapeDtypeStruct((B, C, T_out), x.dtype),
        grid_spec=pltpu.PrefetchScalarGridSpec(
            num_scalar_prefetch=0,
            grid=grid,
            in_specs=[in_spec],
            out_specs=out_spec,
        ),
        compiler_params=pltpu.CompilerParams(
            dimension_semantics=semantics,
            vmem_limit_bytes=vmem_limit,
        ),
        cost_estimate=pl.CostEstimate(
            flops=0, transcendentals=0, bytes_accessed=bytes_accessed
        ),
    )(x)


if __name__ == "__main__":
    key = jax.random.PRNGKey(0)
    k1, k2 = jax.random.split(key)

    # Small shape consistent with the module: (B, C, T) = (2, 4, 16).
    B, C, T = 2, 4, 16
    x = jax.random.normal(k1, (B, C, T), dtype=jnp.float32)

    # Even num_conv_pos_embeddings -> drop last time step (short-sequence path).
    out = jax.block_until_ready(same_pad_layer(x, 128))
    assert out.shape == (B, C, T - 1), out.shape
    assert jnp.allclose(out, x[:, :, :-1]), "mismatch vs reference slice (small)"

    # Odd -> identity (short-circuit, no kernel launch).
    out_id = jax.block_until_ready(same_pad_layer(x, 129))
    assert out_id.shape == (B, C, T)
    assert jnp.allclose(out_id, x), "identity case mismatch"

    # Slightly longer sequence exercising the lane-dense T-tiled path.
    B2, C2, T2 = 2, 16, 640
    x2 = jax.random.normal(k2, (B2, C2, T2), dtype=jnp.float32)
    out2 = jax.block_until_ready(same_pad_layer(x2, 64))
    assert out2.shape == (B2, C2, T2 - 1), out2.shape
    assert jnp.allclose(out2, x2[:, :, :-1]), "mismatch vs reference slice (tiled)"

    print("KERNEL_OK")
</pallas_src>

<mosaic_0001>
module attributes {stable_mosaic.version = 11 : i64} {
  func.func @_copy_prefix_kernel(%arg0: i32, %arg1: i32, %arg2: memref<1x4x16xf32, #tpu.memory_space<vmem>>, %arg3: memref<1x4x15xf32, #tpu.memory_space<vmem>>) attributes {dimension_semantics = [#tpu.dimension_semantics<parallel>, #tpu.dimension_semantics<parallel>], iteration_bounds = array<i64: 2, 1>, scalar_prefetch = 0 : i64, scratch_operands = 0 : i64, tpu.core_type = #tpu.core_type<tc>, window_params = [{transform_indices = @transform_0, window_bounds = array<i64: 1, 4, 16>}, {transform_indices = @transform_1, window_bounds = array<i64: 1, 4, 15>}]} {
    %c0 = arith.constant 0 : index
    %c0_0 = arith.constant 0 : index
    %c0_1 = arith.constant 0 : index
    %0 = vector.load %arg2[%c0, %c0_0, %c0_1] : memref<1x4x16xf32, #tpu.memory_space<vmem>>, vector<1x4x15xf32>
    %c0_2 = arith.constant 0 : index
    %c0_3 = arith.constant 0 : index
    %c0_4 = arith.constant 0 : index
    %1 = vector.load %arg3[%c0_2, %c0_3, %c0_4] : memref<1x4x15xf32, #tpu.memory_space<vmem>>, vector<1x4x15xf32>
    tpu.vector_store %arg3[%c0_2, %c0_3, %c0_4], %0 {strides = array<i32>} : memref<1x4x15xf32, #tpu.memory_space<vmem>>, vector<1x4x15xf32>,
    return
  }
  func.func @transform_0(%arg0: i32, %arg1: i32) -> (i32, i32, i32) {
    %c0_i32 = arith.constant 0 : i32
    %c0_i32_0 = arith.constant 0 : i32
    return %arg0, %arg1, %c0_i32 : i32, i32, i32
  }
  func.func @transform_1(%arg0: i32, %arg1: i32) -> (i32, i32, i32) {
    %c0_i32 = arith.constant 0 : i32
    %c0_i32_0 = arith.constant 0 : i32
    return %arg0, %arg1, %c0_i32 : i32, i32, i32
  }
}

</mosaic_0001>

<llo_original>
// kernel: tpu_custom_call.1
$region0: #{tpu_custom_call.1}
  #allocation0 [shape = 'u32[]', space=smem, size = 0x4, offset = 0x4, fixed_abs, tag = 'smem constant byte address 0x4 - core index']
  #allocation1 [shape = 'u32[144,128]{1,0:T(1,128)}', space=vmem, size = 0x12000, scoped, tag = 'internal scratch']
  %s0 = inlined_call_operand.hbm [shape: f32[2,4,16], index: 0, kind: input, shape index: {}]
  %s1 = inlined_call_operand.hbm [shape: f32[2,4,15], index: 1, kind: output, shape index: {}]
  %s2 = sld [smem:[#allocation0]]
  $region41: #{tpu_custom_call.1} parent=0
    _
  %s4 = ssub.s32 1, %s2
  %s5 = scalar_select 0, %s4, %s2
  $region1: #{tpu_custom_call.1} parent=0
    #allocation2 [shape = 'u8[4096]{0}', space=vmem, size = 0x1000, scoped, tag = 'input window, operand 0']
    #allocation3 [shape = 's32[2]{0}', space=sflag, size = 0x8, scoped, tag = 'scoped memory for tpu_custom_call.1']
    #allocation4 [shape = 's32[2]{0}', space=sflag, size = 0x8, scoped, tag = 'scoped memory for tpu_custom_call.1']
    #allocation5 [shape = 'u8[4096]{0}', space=vmem, size = 0x1000, scoped, tag = 'output window, operand 0']
    %6 = vsyncpa [#allocation3], 0
    %s7 = scalar_lea.sflag [#allocation3], 1
    %8 = vsyncpa %s7, 0
    %9 = vsyncpa [#allocation4], 0
    %s10 = scalar_lea.sflag [#allocation4], 1
    %11 = vsyncpa %s10, 0
    loop: start=0, step=1, limit=4
    $region2: #{tpu_custom_call.1} parent=1 // loop_pre_header
      _
    $region3: #{tpu_custom_call.1} parent=1 // loop_header
      %s13 = sphi 0, %s17
      %p14 = scmp.ge.s32.totalorder %s13, 4
      %s20 = sphi 0, %s32
      %s21 = sphi 0, %s28
      %s22 = sphi 0, %s20
      %s23 = sphi 0, %s21
      %s24 = sphi 0, %s22
      %s25 = sphi 0, %s23
      %s37 = sphi 0, %s39
      %s40 = sphi 0, %s37
      %s41 = sphi 0, %s40
      %s57 = sphi 0, %s41
      %s65 = sphi 0, %s67
      %s68 = sphi 0, %s65
      %s69 = sphi 0, %s68
      %s85 = sphi 0, %s69
    $region4: #{tpu_custom_call.1} parent=1 // loop_header_branch
      %16 = sbr.rel (%p14) target = $region8
    $region5: #{tpu_custom_call.1} parent=1 // loop_body
      %s18 = ssub.s32 %s13, 1
      %s19 = ssub.s32 %s13, 2
      %s26 = sadd.s32 1, %s21
      %p27 = scmp.ge.s32.totalorder %s26, 1
      %s28 = scalar_select %p27, 0, %s26
      %s29 = sadd.s32 1, %s20
      %s30 = scalar_select %p27, %s29, %s20
      %p31 = scmp.ge.s32.totalorder %s30, 2
      %s32 = scalar_select %p31, 0, %s30
      %s33 = ssub.s32 %s20, %s32
      %s34 = ssub.s32 %s21, %s28
      %s35 = sor.u32 %s33, %s34
      %p36 = scmp.eq.s32.totalorder %s35, 0
      %s38 = sadd.s32 %s37, 1
      %s39 = scalar_select %p36, %s37, %s38
      %p42 = pneg %p36
      %p43 = scmp.eq.s32.totalorder %s13, 1
      %p44 = por %p42, %p43
      %p45 = scmp.ne.s32.totalorder %s37, %s40
      %p46 = scmp.eq.s32.totalorder %s13, 0
      %p47 = por %p45, %p46
      %p48 = scmp.ne.s32.totalorder %s37, %s40
      %p49 = scmp.eq.s32.totalorder %s18, 1
      %p50 = por %p48, %p49
      %p51 = scmp.ne.s32.totalorder %s40, %s41
      %p52 = scmp.eq.s32.totalorder %s18, 0
      %p53 = por %p51, %p52
      %p54 = scmp.ne.s32.totalorder %s40, %s41
      %p55 = scmp.eq.s32.totalorder %s19, 1
      %p56 = por %p54, %p55
      %p58 = scmp.ne.s32.totalorder %s41, %s57
      %p59 = scmp.eq.s32.totalorder %s19, 0
      %p60 = por %p58, %p59
      %s61 = ssub.s32 %s20, %s32
      %s62 = ssub.s32 %s21, %s28
      %s63 = sor.u32 %s61, %s62
      %p64 = scmp.eq.s32.totalorder %s63, 0
      %s66 = sadd.s32 %s65, 1
      %s67 = scalar_select %p64, %s65, %s66
      %p70 = pneg %p64
      %p71 = scmp.eq.s32.totalorder %s13, 1
      %p72 = por %p70, %p71
      %p73 = scmp.ne.s32.totalorder %s65, %s68
      %p74 = scmp.eq.s32.totalorder %s13, 0
      %p75 = por %p73, %p74
      %p76 = scmp.ne.s32.totalorder %s65, %s68
      %p77 = scmp.eq.s32.totalorder %s18, 1
      %p78 = por %p76, %p77
      %p79 = scmp.ne.s32.totalorder %s68, %s69
      %p80 = scmp.eq.s32.totalorder %s18, 0
      %p81 = por %p79, %p80
      %p82 = scmp.ne.s32.totalorder %s68, %s69
      %p83 = scmp.eq.s32.totalorder %s19, 1
      %p84 = por %p82, %p83
      %p86 = scmp.ne.s32.totalorder %s69, %s85
      %p87 = scmp.eq.s32.totalorder %s19, 0
      %p88 = por %p86, %p87
      %p89 = scmp.le.s32.totalorder 1, %s13
      %p90 = scmp.lt.s32.totalorder %s13, 3
      %p91 = pnand %p89, %p90
      %p92 = pneg %p91
      // Predicated region
      $region9: #{tpu_custom_call.1} parent=5 // pred_check
        _
      $region10: #{tpu_custom_call.1} parent=5 // pred_check_branch
        %94 = sbr.rel (%p91) target = $region12
      $region11: #{tpu_custom_call.1} parent=5 // pred_region
        %s95 = ssub.s32 %s13, 1
      $region12: #{tpu_custom_call.1} parent=5 // pred_fallthru
        _
      %p96 = scmp.lt.s32.totalorder %s13, 2
      // Predicated region
      $region13: #{tpu_custom_call.1} parent=5 // pred_check
        %p97 = pneg %p96
      $region14: #{tpu_custom_call.1} parent=5 // pred_check_branch
        %99 = sbr.rel (%p97) target = $region16
      $region15: #{tpu_custom_call.1} parent=5 // pred_region
        // Predicated region
        $region17: #{tpu_custom_call.1} parent=15 // pred_check
          %p100 = pneg %p47
        $region18: #{tpu_custom_call.1} parent=15 // pred_check_branch
          %102 = sbr.rel (%p100) target = $region20
        $region19: #{tpu_custom_call.1} parent=15 // pred_region
          %s103 = sand.u32 %s37, 1
          %s104 = scalar_lea.sflag [#allocation3], %s103
          %s105 = sand.u32 %s37, 1
          %s106 = smul.addr %s105, 4
          %s107 = scalar_lea.vmem [#allocation2], %s106
          %s109 = ssub.s32 64, 64
          %110 = vsyncadd %s104, %s109
          %s111 = sadd.s32 %s21, %s20
          %s112 = smul.addr %s111, 64
          %s113 = scalar_lea.hbm %s0, %s112
          %s115 = sshll.u32 %s107, 4
          %s116 = int_to_ptr.vmem [resolvable:$true] %s115
          %118 = dma.hbm_to_vmem [thread:$0]  %s113, 64, %s116, %s104
        $region20: #{tpu_custom_call.1} parent=15 // pred_fallthru
          _
      $region16: #{tpu_custom_call.1} parent=5 // pred_fallthru
        _
      %p119 = scmp.le.s32.totalorder 1, %s13
      %p120 = scmp.lt.s32.totalorder %s13, 3
      %p121 = pnand %p119, %p120
      %p122 = pneg %p121
      // Predicated region
      $region21: #{tpu_custom_call.1} parent=5 // pred_check
        _
      $region22: #{tpu_custom_call.1} parent=5 // pred_check_branch
        %124 = sbr.rel (%p121) target = $region24
      $region23: #{tpu_custom_call.1} parent=5 // pred_region
        %s125 = ssub.s32 %s13, 1
        %s126 = sand.u32 %s40, 1
        %s127 = scalar_lea.sflag [#allocation3], %s126
        %s128 = sand.u32 %s40, 1
        %s129 = smul.addr %s128, 4
        %s130 = scalar_lea.vmem [#allocation2], %s129
        // Predicated region
        $region25: #{tpu_custom_call.1} parent=23 // pred_check
          %p131 = pneg %p53
        $region26: #{tpu_custom_call.1} parent=23 // pred_check_branch
          %133 = sbr.rel (%p131) target = $region28
        $region27: #{tpu_custom_call.1} parent=23 // pred_region
          %134 = dma.done %s127, 64
        $region28: #{tpu_custom_call.1} parent=23 // pred_fallthru
          _
        %s135 = sand.u32 %s40, 1
        %s136 = scalar_lea.sflag [#allocation3], %s135
        %s137 = sand.u32 %s40, 1
        %s138 = smul.addr %s137, 4
        %s139 = scalar_lea.vmem [#allocation2], %s138
        %p140 = pneg %p53
        %p141 = pneg %p50
        %p142 = pneg %p81
        %p143 = pneg %p78
        %s144 = sand.u32 %s68, 1
        %s145 = scalar_lea.sflag [#allocation4], %s144
        %s146 = sand.u32 %s68, 1
        %s147 = smul.addr %s146, 4
        %s148 = scalar_lea.vmem [#allocation5], %s147
        %v149 = vld [vmem:[%s130] sm:$0xf]
        %vm150 = vcmask 117760
        %151 = vst.msk [vmem:[%s148] sm:$0xf] %vm150, %v149
        %s152 = sand.u32 %s68, 1
        %s153 = scalar_lea.sflag [#allocation4], %s152
        %s154 = sand.u32 %s68, 1
        %s155 = smul.addr %s154, 4
        %s156 = scalar_lea.vmem [#allocation5], %s155
        // Predicated region
        $region29: #{tpu_custom_call.1} parent=23 // pred_check
          %p157 = pneg %p78
        $region30: #{tpu_custom_call.1} parent=23 // pred_check_branch
          %159 = sbr.rel (%p157) target = $region32
        $region31: #{tpu_custom_call.1} parent=23 // pred_region
          %s161 = ssub.s32 64, 64
          %162 = vsyncadd %s153, %s161
          %s163 = sadd.s32 %s23, %s22
          %s164 = smul.addr %s163, 64
          %s165 = scalar_lea.hbm %s1, %s164
          %s167 = sshll.u32 %s156, 4
          %s168 = int_to_ptr.vmem [resolvable:$true] %s167
          %170 = dma.vmem_to_hbm [thread:$0]  %s168, 64, %s165, %s153
        $region32: #{tpu_custom_call.1} parent=23 // pred_fallthru
          _
      $region24: #{tpu_custom_call.1} parent=5 // pred_fallthru
        _
      %p171 = scmp.le.s32.totalorder 2, %s13
      // Predicated region
      $region33: #{tpu_custom_call.1} parent=5 // pred_check
        %p172 = pneg %p171
      $region34: #{tpu_custom_call.1} parent=5 // pred_check_branch
        %174 = sbr.rel (%p172) target = $region36
      $region35: #{tpu_custom_call.1} parent=5 // pred_region
        %s175 = ssub.s32 %s13, 2
        // Predicated region
        $region37: #{tpu_custom_call.1} parent=35 // pred_check
          %p176 = pneg %p84
        $region38: #{tpu_custom_call.1} parent=35 // pred_check_branch
          %178 = sbr.rel (%p176) target = $region40
        $region39: #{tpu_custom_call.1} parent=35 // pred_region
          %s179 = sand.u32 %s69, 1
          %s180 = scalar_lea.sflag [#allocation4], %s179
          %s181 = sand.u32 %s69, 1
          %s182 = smul.addr %s181, 4
          %s183 = scalar_lea.vmem [#allocation5], %s182
          %184 = dma.done %s180, 64
        $region40: #{tpu_custom_call.1} parent=35 // pred_fallthru
          _
      $region36: #{tpu_custom_call.1} parent=5 // pred_fallthru
        _
    $region6: #{tpu_custom_call.1} parent=1 // loop_footer
      %s17 = sadd.s32 1, %s13
    $region7: #{tpu_custom_call.1} parent=1 // loop_footer_branch
      %12 = sbr.rel target = $region3
    $region8: #{tpu_custom_call.1} parent=1 // loop_exit
      _
    %185 = vsyncpa [#allocation3], 1
    %s186 = scalar_lea.sflag [#allocation3], 1
    %187 = vsyncpa %s186, 1
    %188 = vsyncpa [#allocation4], 1
    %s189 = scalar_lea.sflag [#allocation4], 1
    %190 = vsyncpa %s189, 1

</llo_original>
